<compile_context>
chip_gen: v6e
topology: v6e:2x2x1
jax: 0.10.0
libtpu: 0.0.40
codegen_flags: <defaults>
</compile_context>

<pallas_src>
import jax
import jax.numpy as jnp
from jax import lax
from jax.experimental import pallas as pl
from jax.experimental.pallas import tpu as pltpu


def _round_up(x, m):
    return (x + m - 1) // m * m


def _tagging_kernel(id_ref, i_ref, a_ref, t_ref, table_ref,
                    w1a_ref, w1b_ref, w1c_ref, b1_ref,
                    w2_ref, b2_ref, w3_ref, b3_ref,
                    out_ref):
    tb = id_ref.shape[0]
    tag_num = table_ref.shape[0]

    # Fused embedding lookup: one-hot(ids) @ resident VMEM table.  K = tag_num
    # is tiny, so the extra dot is free on the mem-bound roofline and avoids
    # materializing `topic` in HBM.
    ids = id_ref[...]                                              # (TB, 1) int32
    tags = lax.broadcasted_iota(jnp.int32, (tb, tag_num), 1)       # (TB, tag_num)
    onehot = jnp.where(ids == tags, 1.0, 0.0)                      # (TB, tag_num) f32
    topic = jnp.dot(onehot, table_ref[...],
                    preferred_element_type=jnp.float32)            # (TB, E) f32

    # Elementwise topic products stay f32 (v5e VPU/EUP have no bf16 path).
    xi = i_ref[...].astype(jnp.float32) * topic
    xa = a_ref[...].astype(jnp.float32) * topic
    xt = t_ref[...].astype(jnp.float32) * topic

    mm = w1a_ref.dtype                                             # f32 or bf16
    # Layer 1 as three split-K dots on the weight slabs -- no lane-axis concat
    # (and its relayout copies) inside the kernel.
    h1 = (jnp.dot(xi.astype(mm), w1a_ref[...], preferred_element_type=jnp.float32)
          + jnp.dot(xa.astype(mm), w1b_ref[...], preferred_element_type=jnp.float32)
          + jnp.dot(xt.astype(mm), w1c_ref[...], preferred_element_type=jnp.float32)
          + b1_ref[...])
    h1 = jnp.maximum(h1, 0.0)

    h2 = jnp.dot(h1.astype(mm), w2_ref[...],
                 preferred_element_type=jnp.float32) + b2_ref[...]
    h2 = jnp.maximum(h2, 0.0)

    logits = jnp.dot(h2.astype(mm), w3_ref[...],
                     preferred_element_type=jnp.float32) + b3_ref[...]   # (TB, 1)
    # (TB, 1) store: batch stays on sublanes, writeback is B*4 bytes total
    # (vs. the previous 128-lane padded B*512) with no sublane->lane relayout.
    out_ref[...] = jax.nn.sigmoid(logits)


def tagging_forward(i_data, a_data, t_data, tag_id, params, *,
                    block_b=4096, matmul_dtype=jnp.float32):
    """Pallas-backed forward of the Tagging module (2-D input path)."""
    table = params["tag_embed"]                      # (tag_num, E), VMEM-resident
    # TODO(synk): for very large tag tables, replace the resident-table one-hot
    # matmul with PrefetchScalarGridSpec + pl.Element per-row embedding gather.
    B, E = i_data.shape
    tag_num = table.shape[0]

    w1, b1 = params["w1"], params["b1"]
    w2, b2 = params["w2"], params["b2"]
    w3, b3 = params["w3"], params["b3"]
    H1, H2 = w1.shape[1], w2.shape[1]

    # Split w1 along K so the kernel never concatenates along the lane axis.
    w1a = w1[:E].astype(matmul_dtype)
    w1b = w1[E:2 * E].astype(matmul_dtype)
    w1c = w1[2 * E:].astype(matmul_dtype)
    w2m = w2.astype(matmul_dtype)
    w3m = w3.astype(matmul_dtype)

    ids2d = tag_id.astype(jnp.int32).reshape(B, 1)   # metadata-only reshape

    in_itemsize = jnp.dtype(i_data.dtype).itemsize
    # Sublane granularity of streamed tiles (packed dtypes use taller tiles).
    gran = 8 if in_itemsize >= 4 else (16 if in_itemsize == 2 else 32)

    # Batch tile: large (per-step overhead ~0.35us; HBM roofline wants big
    # tiles) but capped at ceil(B/2) so both v7x TensorCores always get work.
    TB = max(gran, min(_round_up(block_b, gran),
                       _round_up(pl.cdiv(B, 2), gran)))
    grid = (pl.cdiv(B, TB),)       # ragged last tile masked by Pallas (no jnp.pad)

    row_spec = pl.BlockSpec((TB, E), lambda b: (b, 0))   # streamed batch tiles
    id_spec = pl.BlockSpec((TB, 1), lambda b: (b, 0))

    def resident(shape):                                 # stays in VMEM across steps
        return pl.BlockSpec(shape, lambda b: (0, 0))

    mm_itemsize = jnp.dtype(matmul_dtype).itemsize
    resident_bytes = ((w1a.size + w1b.size + w1c.size + w2m.size + w3m.size)
                      * mm_itemsize
                      + (b1.size + b2.size + b3.size + table.size) * 4)
    # Per pipeline buffer: three (TB,E) activation tiles plus the lane-padded
    # (TB,1) id / output tiles; double-buffered, plus headroom for in-kernel
    # intermediates.  Well under v7x's 64 MiB physical VMEM at default block_b.
    stream_bytes = 3 * TB * E * in_itemsize + 2 * TB * 128 * 4
    vmem_need = 2 * stream_bytes + resident_bytes + 6 * TB * max(E, H1) * 4
    vmem_limit = int(min(60 * 1024 * 1024, max(24 * 1024 * 1024, 2 * vmem_need)))

    cost = pl.CostEstimate(
        flops=2 * B * (tag_num * E + 3 * E * H1 + H1 * H2 + H2),
        transcendentals=B,
        bytes_accessed=3 * B * E * in_itemsize + 2 * B * 4 + resident_bytes,
    )

    out = pl.pallas_call(
        _tagging_kernel,
        out_shape=jax.ShapeDtypeStruct((B, 1), jnp.float32),
        grid=grid,
        in_specs=[id_spec, row_spec, row_spec, row_spec,
                  resident(table.shape),
                  resident(w1a.shape), resident(w1b.shape), resident(w1c.shape),
                  resident(b1.shape),
                  resident(w2m.shape), resident(b2.shape),
                  resident(w3m.shape), resident(b3.shape)],
        out_specs=pl.BlockSpec((TB, 1), lambda b: (b, 0)),
        compiler_params=pltpu.CompilerParams(
            dimension_semantics=("parallel",),   # batch tiles split across TCs (v7x)
            vmem_limit_bytes=vmem_limit),
        cost_estimate=cost,
    )(ids2d, i_data, a_data, t_data, table,
      w1a, w1b, w1c, b1, w2m, b2, w3m, b3)
    return out


def init_params(key, tag_num, embed_size):
    """Deterministic synthetic parameters matching the module's __init__ shapes."""
    input_size = 3 * embed_size
    h1, h2 = input_size // 2, input_size // 4
    ks = jax.random.split(key, 7)

    def lin(kw, fan_in, fan_out):
        bound = 1.0 / jnp.sqrt(fan_in)
        return jax.random.uniform(kw, (fan_in, fan_out), jnp.float32, -bound, bound)

    return {
        # Linear weights stored (in_features, out_features); biases as (1, out).
        "w1": lin(ks[0], input_size, h1),
        "b1": jax.random.uniform(ks[1], (1, h1), jnp.float32, -0.05, 0.05),
        "w2": lin(ks[2], h1, h2),
        "b2": jax.random.uniform(ks[3], (1, h2), jnp.float32, -0.05, 0.05),
        "w3": lin(ks[4], h2, 1),
        "b3": jax.random.uniform(ks[5], (1, 1), jnp.float32, -0.05, 0.05),
        "tag_embed": jax.random.normal(ks[6], (tag_num, embed_size), jnp.float32),
    }


def _reference_forward(i_data, a_data, t_data, tag_id, params):
    """Pure-JAX reference mirroring the PyTorch module."""
    topic = jnp.take(params["tag_embed"], tag_id, axis=0)
    x = jnp.concatenate([i_data * topic, a_data * topic, t_data * topic], axis=1)
    h1 = jnp.maximum(x @ params["w1"] + params["b1"], 0.0)
    h2 = jnp.maximum(h1 @ params["w2"] + params["b2"], 0.0)
    return jax.nn.sigmoid(h2 @ params["w3"] + params["b3"])


if __name__ == "__main__":
    E = 32            # embed_size  -> input_size = 96, hidden = 48, 24
    TAG_NUM = 8

    key = jax.random.PRNGKey(0)
    kp, ki, ka, kt, kid = jax.random.split(key, 5)
    params = init_params(kp, TAG_NUM, E)

    # --- small batch (single grid step), f32 ----------------------------------
    B = 8
    i_data = jax.random.normal(ki, (B, E), jnp.float32)
    a_data = jax.random.normal(ka, (B, E), jnp.float32)
    t_data = jax.random.normal(kt, (B, E), jnp.float32)
    tag_id = jax.random.randint(kid, (B,), 0, TAG_NUM)

    out = jax.block_until_ready(tagging_forward(i_data, a_data, t_data, tag_id, params))
    ref = _reference_forward(i_data, a_data, t_data, tag_id, params)
    assert out.shape == (B, 1)
    assert jnp.allclose(out, ref, atol=1e-5, rtol=1e-5)

    # --- non-multiple batch: multi-step grid + ragged last tile (no jnp.pad) ---
    B2 = 300
    ki2, ka2, kt2, kid2 = jax.random.split(jax.random.PRNGKey(1), 4)
    i2 = jax.random.normal(ki2, (B2, E), jnp.float32)
    a2 = jax.random.normal(ka2, (B2, E), jnp.float32)
    t2 = jax.random.normal(kt2, (B2, E), jnp.float32)
    id2 = jax.random.randint(kid2, (B2,), 0, TAG_NUM)

    out2 = jax.block_until_ready(
        tagging_forward(i2, a2, t2, id2, params, block_b=128))
    ref2 = _reference_forward(i2, a2, t2, id2, params)
    assert out2.shape == (B2, 1)
    assert jnp.allclose(out2, ref2, atol=1e-5, rtol=1e-5)

    # --- bf16 streamed activations + bf16 matmul operands (f32 accumulation) ---
    B3 = 512
    ki3, ka3, kt3, kid3 = jax.random.split(jax.random.PRNGKey(2), 4)
    i3 = jax.random.normal(ki3, (B3, E), jnp.float32).astype(jnp.bfloat16)
    a3 = jax.random.normal(ka3, (B3, E), jnp.float32).astype(jnp.bfloat16)
    t3 = jax.random.normal(kt3, (B3, E), jnp.float32).astype(jnp.bfloat16)
    id3 = jax.random.randint(kid3, (B3,), 0, TAG_NUM)

    out3 = jax.block_until_ready(
        tagging_forward(i3, a3, t3, id3, params, matmul_dtype=jnp.bfloat16))
    ref3 = _reference_forward(i3.astype(jnp.float32), a3.astype(jnp.float32),
                              t3.astype(jnp.float32), id3, params)
    assert out3.shape == (B3, 1)
    assert jnp.allclose(out3, ref3, atol=5e-2, rtol=5e-2)

    print("KERNEL_OK")
</pallas_src>

<mosaic_0001>
module attributes {stable_mosaic.version = 11 : i64} {
  func.func @_tagging_kernel(%arg0: i32, %arg1: memref<8x1xi32, #tpu.memory_space<vmem>>, %arg2: memref<8x32xf32, #tpu.memory_space<vmem>>, %arg3: memref<8x32xf32, #tpu.memory_space<vmem>>, %arg4: memref<8x32xf32, #tpu.memory_space<vmem>>, %arg5: memref<8x32xf32, #tpu.memory_space<vmem>>, %arg6: memref<32x48xf32, #tpu.memory_space<vmem>>, %arg7: memref<32x48xf32, #tpu.memory_space<vmem>>, %arg8: memref<32x48xf32, #tpu.memory_space<vmem>>, %arg9: memref<1x48xf32, #tpu.memory_space<vmem>>, %arg10: memref<48x24xf32, #tpu.memory_space<vmem>>, %arg11: memref<1x24xf32, #tpu.memory_space<vmem>>, %arg12: memref<24x1xf32, #tpu.memory_space<vmem>>, %arg13: memref<1x1xf32, #tpu.memory_space<vmem>>, %arg14: memref<8x1xf32, #tpu.memory_space<vmem>>) attributes {dimension_semantics = [#tpu.dimension_semantics<parallel>], iteration_bounds = array<i64: 1>, scalar_prefetch = 0 : i64, scratch_operands = 0 : i64, tpu.core_type = #tpu.core_type<tc>, window_params = [{transform_indices = @transform_0, window_bounds = array<i64: 8, 1>}, {transform_indices = @transform_1, window_bounds = array<i64: 8, 32>}, {transform_indices = @transform_2, window_bounds = array<i64: 8, 32>}, {transform_indices = @transform_3, window_bounds = array<i64: 8, 32>}, {pipeline_mode = #tpu.pipeline_mode<synchronous>, transform_indices = @transform_4, window_bounds = array<i64: 8, 32>}, {pipeline_mode = #tpu.pipeline_mode<synchronous>, transform_indices = @transform_5, window_bounds = array<i64: 32, 48>}, {pipeline_mode = #tpu.pipeline_mode<synchronous>, transform_indices = @transform_6, window_bounds = array<i64: 32, 48>}, {pipeline_mode = #tpu.pipeline_mode<synchronous>, transform_indices = @transform_7, window_bounds = array<i64: 32, 48>}, {pipeline_mode = #tpu.pipeline_mode<synchronous>, transform_indices = @transform_8, window_bounds = array<i64: 1, 48>}, {pipeline_mode = #tpu.pipeline_mode<synchronous>, transform_indices = @transform_9, window_bounds = array<i64: 48, 24>}, {pipeline_mode = #tpu.pipeline_mode<synchronous>, transform_indices = @transform_10, window_bounds = array<i64: 1, 24>}, {pipeline_mode = #tpu.pipeline_mode<synchronous>, transform_indices = @transform_11, window_bounds = array<i64: 24, 1>}, {pipeline_mode = #tpu.pipeline_mode<synchronous>, transform_indices = @transform_12, window_bounds = array<i64: 1, 1>}, {transform_indices = @transform_13, window_bounds = array<i64: 8, 1>}]} {
    %c0 = arith.constant 0 : index
    %c0_0 = arith.constant 0 : index
    %0 = vector.load %arg1[%c0, %c0_0] : memref<8x1xi32, #tpu.memory_space<vmem>>, vector<8x1xi32>
    %1 = tpu.iota {dimensions = array<i32: 1>} : vector<8x8xi32>
    %2 = vector.broadcast %0 : vector<8x1xi32> to vector<8x8xi32>
    %3 = arith.cmpi eq, %2, %1 : vector<8x8xi32>
    %cst = arith.constant 1.000000e+00 : f32
    %cst_1 = arith.constant 0.000000e+00 : f32
    %4 = vector.broadcast %cst : f32 to vector<8x8xf32>
    %5 = vector.broadcast %cst_1 : f32 to vector<8x8xf32>
    %6 = arith.select %3, %4, %5 : vector<8x8xi1>, vector<8x8xf32>
    %c0_2 = arith.constant 0 : index
    %c0_3 = arith.constant 0 : index
    %7 = vector.load %arg5[%c0_2, %c0_3] : memref<8x32xf32, #tpu.memory_space<vmem>>, vector<8x32xf32>
    %cst_4 = arith.constant dense<0.000000e+00> : vector<8x32xf32>
    %8 = tpu.matmul %6, %7, %cst_4 {dimension_numbers = #tpu.dot_dimension_numbers<[1], [0], [0], [1], [0, 0, 1, 1], [], []>} : vector<8x8xf32>, vector<8x32xf32>, vector<8x32xf32> -> vector<8x32xf32>
    %c0_5 = arith.constant 0 : index
    %c0_6 = arith.constant 0 : index
    %9 = vector.load %arg2[%c0_5, %c0_6] : memref<8x32xf32, #tpu.memory_space<vmem>>, vector<8x32xf32>
    %10 = arith.mulf %9, %8 : vector<8x32xf32>
    %c0_7 = arith.constant 0 : index
    %c0_8 = arith.constant 0 : index
    %11 = vector.load %arg3[%c0_7, %c0_8] : memref<8x32xf32, #tpu.memory_space<vmem>>, vector<8x32xf32>
    %12 = arith.mulf %11, %8 : vector<8x32xf32>
    %c0_9 = arith.constant 0 : index
    %c0_10 = arith.constant 0 : index
    %13 = vector.load %arg4[%c0_9, %c0_10] : memref<8x32xf32, #tpu.memory_space<vmem>>, vector<8x32xf32>
    %14 = arith.mulf %13, %8 : vector<8x32xf32>
    %c0_11 = arith.constant 0 : index
    %c0_12 = arith.constant 0 : index
    %15 = vector.load %arg6[%c0_11, %c0_12] : memref<32x48xf32, #tpu.memory_space<vmem>>, vector<32x48xf32>
    %cst_13 = arith.constant dense<0.000000e+00> : vector<8x48xf32>
    %16 = tpu.matmul %10, %15, %cst_13 {dimension_numbers = #tpu.dot_dimension_numbers<[1], [0], [0], [1], [0, 0, 1, 1], [], []>} : vector<8x32xf32>, vector<32x48xf32>, vector<8x48xf32> -> vector<8x48xf32>
    %c0_14 = arith.constant 0 : index
    %c0_15 = arith.constant 0 : index
    %17 = vector.load %arg7[%c0_14, %c0_15] : memref<32x48xf32, #tpu.memory_space<vmem>>, vector<32x48xf32>
    %cst_16 = arith.constant dense<0.000000e+00> : vector<8x48xf32>
    %18 = tpu.matmul %12, %17, %cst_16 {dimension_numbers = #tpu.dot_dimension_numbers<[1], [0], [0], [1], [0, 0, 1, 1], [], []>} : vector<8x32xf32>, vector<32x48xf32>, vector<8x48xf32> -> vector<8x48xf32>
    %19 = arith.addf %16, %18 : vector<8x48xf32>
    %c0_17 = arith.constant 0 : index
    %c0_18 = arith.constant 0 : index
    %20 = vector.load %arg8[%c0_17, %c0_18] : memref<32x48xf32, #tpu.memory_space<vmem>>, vector<32x48xf32>
    %cst_19 = arith.constant dense<0.000000e+00> : vector<8x48xf32>
    %21 = tpu.matmul %14, %20, %cst_19 {dimension_numbers = #tpu.dot_dimension_numbers<[1], [0], [0], [1], [0, 0, 1, 1], [], []>} : vector<8x32xf32>, vector<32x48xf32>, vector<8x48xf32> -> vector<8x48xf32>
    %22 = arith.addf %19, %21 : vector<8x48xf32>
    %c0_20 = arith.constant 0 : index
    %c0_21 = arith.constant 0 : index
    %23 = vector.load %arg9[%c0_20, %c0_21] : memref<1x48xf32, #tpu.memory_space<vmem>>, vector<1x48xf32>
    %24 = vector.broadcast %23 : vector<1x48xf32> to vector<8x48xf32>
    %25 = arith.addf %22, %24 : vector<8x48xf32>
    %cst_22 = arith.constant 0.000000e+00 : f32
    %26 = vector.broadcast %cst_22 : f32 to vector<8x48xf32>
    %27 = arith.maximumf %25, %26 : vector<8x48xf32>
    %c0_23 = arith.constant 0 : index
    %c0_24 = arith.constant 0 : index
    %28 = vector.load %arg10[%c0_23, %c0_24] : memref<48x24xf32, #tpu.memory_space<vmem>>, vector<48x24xf32>
    %cst_25 = arith.constant dense<0.000000e+00> : vector<8x24xf32>
    %29 = tpu.matmul %27, %28, %cst_25 {dimension_numbers = #tpu.dot_dimension_numbers<[1], [0], [0], [1], [0, 0, 1, 1], [], []>} : vector<8x48xf32>, vector<48x24xf32>, vector<8x24xf32> -> vector<8x24xf32>
    %c0_26 = arith.constant 0 : index
    %c0_27 = arith.constant 0 : index
    %30 = vector.load %arg11[%c0_26, %c0_27] : memref<1x24xf32, #tpu.memory_space<vmem>>, vector<1x24xf32>
    %31 = vector.broadcast %30 : vector<1x24xf32> to vector<8x24xf32>
    %32 = arith.addf %29, %31 : vector<8x24xf32>
    %cst_28 = arith.constant 0.000000e+00 : f32
    %33 = vector.broadcast %cst_28 : f32 to vector<8x24xf32>
    %34 = arith.maximumf %32, %33 : vector<8x24xf32>
    %c0_29 = arith.constant 0 : index
    %c0_30 = arith.constant 0 : index
    %35 = vector.load %arg12[%c0_29, %c0_30] : memref<24x1xf32, #tpu.memory_space<vmem>>, vector<24x1xf32>
    %cst_31 = arith.constant dense<0.000000e+00> : vector<8x1xf32>
    %36 = tpu.matmul %34, %35, %cst_31 {dimension_numbers = #tpu.dot_dimension_numbers<[1], [0], [0], [1], [0, 0, 1, 1], [], []>} : vector<8x24xf32>, vector<24x1xf32>, vector<8x1xf32> -> vector<8x1xf32>
    %c0_32 = arith.constant 0 : index
    %c0_33 = arith.constant 0 : index
    %37 = vector.load %arg13[%c0_32, %c0_33] : memref<1x1xf32, #tpu.memory_space<vmem>>, vector<1x1xf32>
    %38 = vector.broadcast %37 : vector<1x1xf32> to vector<8x1xf32>
    %39 = arith.addf %36, %38 : vector<8x1xf32>
    %40 = arith.negf %39 : vector<8x1xf32>
    %41 = math.exp %40 : vector<8x1xf32>
    %cst_34 = arith.constant 1.000000e+00 : f32
    %42 = vector.broadcast %cst_34 : f32 to vector<8x1xf32>
    %43 = arith.addf %42, %41 : vector<8x1xf32>
    %44 = arith.divf %42, %43 : vector<8x1xf32>
    %c0_35 = arith.constant 0 : index
    %c0_36 = arith.constant 0 : index
    %45 = vector.load %arg14[%c0_35, %c0_36] : memref<8x1xf32, #tpu.memory_space<vmem>>, vector<8x1xf32>
    tpu.vector_store %arg14[%c0_35, %c0_36], %44 {strides = array<i32>} : memref<8x1xf32, #tpu.memory_space<vmem>>, vector<8x1xf32>,
    return
  }
  func.func @transform_0(%arg0: i32) -> (i32, i32) {
    %c0_i32 = arith.constant 0 : i32
    %c0_i32_0 = arith.constant 0 : i32
    return %arg0, %c0_i32 : i32, i32
  }
  func.func @transform_1(%arg0: i32) -> (i32, i32) {
    %c0_i32 = arith.constant 0 : i32
    %c0_i32_0 = arith.constant 0 : i32
    return %arg0, %c0_i32 : i32, i32
  }
  func.func @transform_2(%arg0: i32) -> (i32, i32) {
    %c0_i32 = arith.constant 0 : i32
    %c0_i32_0 = arith.constant 0 : i32
    return %arg0, %c0_i32 : i32, i32
  }
  func.func @transform_3(%arg0: i32) -> (i32, i32) {
    %c0_i32 = arith.constant 0 : i32
    %c0_i32_0 = arith.constant 0 : i32
    return %arg0, %c0_i32 : i32, i32
  }
  func.func @transform_4(%arg0: i32) -> (i32, i32) {
    %c0_i32 = arith.constant 0 : i32
    %c0_i32_0 = arith.constant 0 : i32
    %c0_i32_1 = arith.constant 0 : i32
    return %c0_i32, %c0_i32_0 : i32, i32
  }
  func.func @transform_5(%arg0: i32) -> (i32, i32) {
    %c0_i32 = arith.constant 0 : i32
    %c0_i32_0 = arith.constant 0 : i32
    %c0_i32_1 = arith.constant 0 : i32
    return %c0_i32, %c0_i32_0 : i32, i32
  }
  func.func @transform_6(%arg0: i32) -> (i32, i32) {
    %c0_i32 = arith.constant 0 : i32
    %c0_i32_0 = arith.constant 0 : i32
    %c0_i32_1 = arith.constant 0 : i32
    return %c0_i32, %c0_i32_0 : i32, i32
  }
  func.func @transform_7(%arg0: i32) -> (i32, i32) {
    %c0_i32 = arith.constant 0 : i32
    %c0_i32_0 = arith.constant 0 : i32
    %c0_i32_1 = arith.constant 0 : i32
    return %c0_i32, %c0_i32_0 : i32, i32
  }
  func.func @transform_8(%arg0: i32) -> (i32, i32) {
    %c0_i32 = arith.constant 0 : i32
    %c0_i32_0 = arith.constant 0 : i32
    %c0_i32_1 = arith.constant 0 : i32
    return %c0_i32, %c0_i32_0 : i32, i32
  }
  func.func @transform_9(%arg0: i32) -> (i32, i32) {
    %c0_i32 = arith.constant 0 : i32
    %c0_i32_0 = arith.constant 0 : i32
    %c0_i32_1 = arith.constant 0 : i32
    return %c0_i32, %c0_i32_0 : i32, i32
  }
  func.func @transform_10(%arg0: i32) -> (i32, i32) {
    %c0_i32 = arith.constant 0 : i32
    %c0_i32_0 = arith.constant 0 : i32
    %c0_i32_1 = arith.constant 0 : i32
    return %c0_i32, %c0_i32_0 : i32, i32
  }
  func.func @transform_11(%arg0: i32) -> (i32, i32) {
    %c0_i32 = arith.constant 0 : i32
    %c0_i32_0 = arith.constant 0 : i32
    %c0_i32_1 = arith.constant 0 : i32
    return %c0_i32, %c0_i32_0 : i32, i32
  }
  func.func @transform_12(%arg0: i32) -> (i32, i32) {
    %c0_i32 = arith.constant 0 : i32
    %c0_i32_0 = arith.constant 0 : i32
    %c0_i32_1 = arith.constant 0 : i32
    return %c0_i32, %c0_i32_0 : i32, i32
  }
  func.func @transform_13(%arg0: i32) -> (i32, i32) {
    %c0_i32 = arith.constant 0 : i32
    %c0_i32_0 = arith.constant 0 : i32
    return %arg0, %c0_i32 : i32, i32
  }
}

</mosaic_0001>

<llo_original>
// kernel: tpu_custom_call.1
$region0: #{tpu_custom_call.1}
  #allocation0 [shape = 'u32[]', space=smem, size = 0x4, offset = 0x4, fixed_abs, tag = 'smem constant byte address 0x4 - core index']
  #allocation1 [shape = 'u32[144,128]{1,0:T(1,128)}', space=vmem, size = 0x12000, scoped, tag = 'internal scratch']
  #allocation2 [shape = 'f32[1,1]{1,0:T(1,128)S(1)}', space=vmem, size = 0x200, scoped, tag = 'scoped memory for tpu_custom_call.1']
  %s0 = inlined_call_operand.vmem [shape: s32[8,1], index: 0, kind: input, shape index: {}]
  %s1 = inlined_call_operand.hbm [shape: f32[8,32], index: 1, kind: input, shape index: {}]
  %s2 = inlined_call_operand.hbm [shape: f32[8,32], index: 2, kind: input, shape index: {}]
  %s3 = inlined_call_operand.hbm [shape: f32[8,32], index: 3, kind: input, shape index: {}]
  %s4 = inlined_call_operand.hbm [shape: f32[8,32], index: 4, kind: input, shape index: {}]
  %s5 = inlined_call_operand.vmem [shape: f32[32,48], index: 5, kind: input, shape index: {}]
  %s6 = inlined_call_operand.vmem [shape: f32[32,48], index: 6, kind: input, shape index: {}]
  %s7 = inlined_call_operand.vmem [shape: f32[32,48], index: 7, kind: input, shape index: {}]
  %s8 = inlined_call_operand.vmem [shape: f32[1,48], index: 8, kind: input, shape index: {}]
  %s9 = inlined_call_operand.vmem [shape: f32[48,24], index: 9, kind: input, shape index: {}]
  %s10 = inlined_call_operand.vmem [shape: f32[1,24], index: 10, kind: input, shape index: {}]
  %s11 = inlined_call_operand.vmem [shape: f32[24,1], index: 11, kind: input, shape index: {}]
  %s12 = inlined_call_operand.<no memory space> [shape: f32[1,1], index: 12, kind: input, shape index: {}]
  %s13 = inlined_call_operand.vmem [shape: f32[8,1], index: 13, kind: output, shape index: {}]
  %s14 = sld [smem:[#allocation0]]
  $region78: #{tpu_custom_call.1} parent=0
    _
  %s16 = ssub.s32 1, %s14
  %s17 = scalar_select 0, %s16, %s14
  %v18 = vstv %s12
  %19 = vst [vmem:[#allocation2] sm:$0x1] %v18
  $region1: #{tpu_custom_call.1} parent=0
    #allocation3 [shape = 'u8[4096]{0}', space=vmem, size = 0x1000, scoped, tag = 'input window, operand 1, single buffered']
    #allocation4 [shape = 's32[1]{0}', space=sflag, size = 0x4, scoped, tag = 'scoped memory for tpu_custom_call.1']
    #allocation5 [shape = 'u8[4096]{0}', space=vmem, size = 0x1000, scoped, tag = 'input window, operand 2, single buffered']
    #allocation6 [shape = 's32[1]{0}', space=sflag, size = 0x4, scoped, tag = 'scoped memory for tpu_custom_call.1']
    #allocation7 [shape = 'u8[4096]{0}', space=vmem, size = 0x1000, scoped, tag = 'input window, operand 3, single buffered']
    #allocation8 [shape = 'u8[4096]{0}', space=vmem, size = 0x1000, scoped, tag = 'input window, operand 4, single buffered']
    #allocation9 [shape = 's32[1]{0}', space=sflag, size = 0x4, scoped, tag = 'scoped memory for tpu_custom_call.1']
    %20 = vsyncpa [#allocation4], 0
    %21 = vsyncpa [#allocation6], 0
    %22 = vsyncpa [#allocation9], 0
    // Predicated region
    $region2: #{tpu_custom_call.1} parent=1 // pred_check
      _
    $region3: #{tpu_custom_call.1} parent=1 // pred_check_branch
      %24 = sbr.rel (0) target = $region5
    $region4: #{tpu_custom_call.1} parent=1 // pred_region
      _
    $region5: #{tpu_custom_call.1} parent=1 // pred_fallthru
      _
    // Predicated region
    $region6: #{tpu_custom_call.1} parent=1 // pred_check
      _
    $region7: #{tpu_custom_call.1} parent=1 // pred_check_branch
      %26 = sbr.rel (0) target = $region9
    $region8: #{tpu_custom_call.1} parent=1 // pred_region
      %s28 = ssub.s32 128, 128
      %29 = vsyncadd [#allocation4], %s28
      %s31 = sshll.u32 [#allocation3], 4
      %s32 = int_to_ptr.vmem [resolvable:$true] %s31
      %34 = dma.hbm_to_vmem [thread:$0]  %s1, 128, %s32, [#allocation4]
    $region9: #{tpu_custom_call.1} parent=1 // pred_fallthru
      _
    // Predicated region
    $region10: #{tpu_custom_call.1} parent=1 // pred_check
      _
    $region11: #{tpu_custom_call.1} parent=1 // pred_check_branch
      %36 = sbr.rel (0) target = $region13
    $region12: #{tpu_custom_call.1} parent=1 // pred_region
      %s38 = ssub.s32 128, 128
      %39 = vsyncadd [#allocation6], %s38
      %s41 = sshll.u32 [#allocation5], 4
      %s42 = int_to_ptr.vmem [resolvable:$true] %s41
      %44 = dma.hbm_to_vmem [thread:$0]  %s2, 128, %s42, [#allocation6]
    $region13: #{tpu_custom_call.1} parent=1 // pred_fallthru
      _
    // Predicated region
    $region14: #{tpu_custom_call.1} parent=1 // pred_check
      _
    $region15: #{tpu_custom_call.1} parent=1 // pred_check_branch
      %46 = sbr.rel (0) target = $region17
    $region16: #{tpu_custom_call.1} parent=1 // pred_region
      %s48 = ssub.s32 128, 128
      %49 = vsyncadd [#allocation6], %s48
      %s51 = sshll.u32 [#allocation7], 4
      %s52 = int_to_ptr.vmem [resolvable:$true] %s51
      %54 = dma.hbm_to_vmem [thread:$0]  %s3, 128, %s52, [#allocation6]
    $region17: #{tpu_custom_call.1} parent=1 // pred_fallthru
      _
    // Predicated region
    $region18: #{tpu_custom_call.1} parent=1 // pred_check
      _
    $region19: #{tpu_custom_call.1} parent=1 // pred_check_branch
      %56 = sbr.rel (0) target = $region21
    $region20: #{tpu_custom_call.1} parent=1 // pred_region
      %s58 = ssub.s32 128, 128
      %59 = vsyncadd [#allocation9], %s58
      %s61 = sshll.u32 [#allocation8], 4
      %s62 = int_to_ptr.vmem [resolvable:$true] %s61
      %64 = dma.hbm_to_vmem [thread:$0]  %s4, 128, %s62, [#allocation9]
    $region21: #{tpu_custom_call.1} parent=1 // pred_fallthru
      _
    // Predicated region
    $region22: #{tpu_custom_call.1} parent=1 // pred_check
      _
    $region23: #{tpu_custom_call.1} parent=1 // pred_check_branch
      %66 = sbr.rel (0) target = $region25
    $region24: #{tpu_custom_call.1} parent=1 // pred_region
      _
    $region25: #{tpu_custom_call.1} parent=1 // pred_fallthru
      _
    // Predicated region
    $region26: #{tpu_custom_call.1} parent=1 // pred_check
      _
    $region27: #{tpu_custom_call.1} parent=1 // pred_check_branch
      %68 = sbr.rel (0) target = $region29
    $region28: #{tpu_custom_call.1} parent=1 // pred_region
      _
    $region29: #{tpu_custom_call.1} parent=1 // pred_fallthru
      _
    // Predicated region
    $region30: #{tpu_custom_call.1} parent=1 // pred_check
      _
    $region31: #{tpu_custom_call.1} parent=1 // pred_check_branch
      %70 = sbr.rel (0) target = $region33
    $region32: #{tpu_custom_call.1} parent=1 // pred_region
      _
    $region33: #{tpu_custom_call.1} parent=1 // pred_fallthru
      _
    // Predicated region
    $region34: #{tpu_custom_call.1} parent=1 // pred_check
      _
    $region35: #{tpu_custom_call.1} parent=1 // pred_check_branch
      %72 = sbr.rel (0) target = $region37
    $region36: #{tpu_custom_call.1} parent=1 // pred_region
      _
    $region37: #{tpu_custom_call.1} parent=1 // pred_fallthru
      _
    // Predicated region
    $region38: #{tpu_custom_call.1} parent=1 // pred_check
      _
    $region39: #{tpu_custom_call.1} parent=1 // pred_check_branch
      %74 = sbr.rel (0) target = $region41
    $region40: #{tpu_custom_call.1} parent=1 // pred_region
      _
    $region41: #{tpu_custom_call.1} parent=1 // pred_fallthru
      _
    // Predicated region
    $region42: #{tpu_custom_call.1} parent=1 // pred_check
      _
    $region43: #{tpu_custom_call.1} parent=1 // pred_check_branch
      %76 = sbr.rel (0) target = $region45
    $region44: #{tpu_custom_call.1} parent=1 // pred_region
      _
    $region45: #{tpu_custom_call.1} parent=1 // pred_fallthru
      _
    // Predicated region
    $region46: #{tpu_custom_call.1} parent=1 // pred_check
      _
    $region47: #{tpu_custom_call.1} parent=1 // pred_check_branch
      %78 = sbr.rel (0) target = $region49
    $region48: #{tpu_custom_call.1} parent=1 // pred_region
      _
    $region49: #{tpu_custom_call.1} parent=1 // pred_fallthru
      _
    // Predicated region
    $region50: #{tpu_custom_call.1} parent=1 // pred_check
      _
    $region51: #{tpu_custom_call.1} parent=1 // pred_check_branch
      %80 = sbr.rel (0) target = $region53
    $region52: #{tpu_custom_call.1} parent=1 // pred_region
      _
    $region53: #{tpu_custom_call.1} parent=1 // pred_fallthru
      _
    // Predicated region
    $region54: #{tpu_custom_call.1} parent=1 // pred_check
      _
    $region55: #{tpu_custom_call.1} parent=1 // pred_check_branch
      %82 = sbr.rel (0) target = $region57
    $region56: #{tpu_custom_call.1} parent=1 // pred_region
      %83 = dma.done [#allocation4], 128
    $region57: #{tpu_custom_call.1} parent=1 // pred_fallthru
      _
    // Predicated region
    $region58: #{tpu_custom_call.1} parent=1 // pred_check
      _
    $region59: #{tpu_custom_call.1} parent=1 // pred_check_branch
      %85 = sbr.rel (0) target = $region61
    $region60: #{tpu_custom_call.1} parent=1 // pred_region
      %86 = dma.done [#allocation6], 128
    $region61: #{tpu_custom_call.1} parent=1 // pred_fallthru
      _
    // Predicated region
    $region62: #{tpu_custom_call.1} parent=1 // pred_check
      _
    $region63: #{tpu_custom_call.1} parent=1 // pred_check_branch
      %88 = sbr.rel (0) target = $region65
    $region64: #{tpu_custom_call.1} parent=1 // pred_region
      %89 = dma.done [#allocation6], 128
    $region65: #{tpu_custom_call.1} parent=1 // pred_fallthru
      _
    // Predicated region
    $region66: #{tpu_custom_call.1} parent=1 // pred_check
      _
    $region67: #{tpu_custom_call.1} parent=1 // pred_check_branch
      %91 = sbr.rel (0) target = $region69
    $region68: #{tpu_custom_call.1} parent=1 // pred_region
      %92 = dma.done [#allocation9], 128
    $region69: #{tpu_custom_call.1} parent=1 // pred_fallthru
      _
    %v93 = vld [vmem:[%s0] sm:$0xff]
    %v94 = vlaneseq
    %v95 = vand.u32 %v94, 127
    %96 = vset.pattern.permute.xlu0 0
    %97 = vperm.xlu0 %96, %v93
    %v98 = vpop.permute.xlu0 %97
    %vm99 = vcmp.eq.s32.totalorder %v98, %v95
    %v100 = vsel %vm99, 1.0, 0.0
    %v101 = vld [vmem:[#allocation8] sm:$0xff]
    %vm102 = vcmask 64512
    %v104 = vsel %vm102, %v100, 0
    %106 = vmatprep.subr.mxu0 0.0
    %107 = vmatpush1.msra.mxu0 0.0
    %108 = vmatprep.subr.mxu0 0.0
    %109 = vmatpush1.msra.mxu0 0.0
    %110 = vmatprep.subr.mxu0 0.0
    %111 = vmatpush1.msra.mxu0 0.0
    %112 = vmatprep.subr.mxu0 0.0
    %113 = vmatpush1.msra.mxu0 0.0
    %114 = vmatprep.subr.mxu0 0.0
    %115 = vmatpush1.msra.mxu0 0.0
    %116 = vmatprep.subr.mxu0 0.0
    %117 = vmatpush1.msra.mxu0 0.0
    %118 = vmatprep.subr.mxu0 0.0
    %119 = vmatpush1.msra.mxu0 0.0
    %120 = vmatprep.subr.mxu0 0.0
    %121 = vmatpush1.msra.mxu0 0.0
    %122 = vmatprep.subr.mxu0 0.0
    %123 = vmatpush1.msra.mxu0 0.0
    %124 = vmatprep.subr.mxu0 0.0
    %125 = vmatpush1.msra.mxu0 0.0
    %126 = vmatprep.subr.mxu0 0.0
    %127 = vmatpush1.msra.mxu0 0.0
    %128 = vmatprep.subr.mxu0 0.0
    %129 = vmatpush1.msra.mxu0 0.0
    %130 = vmatprep.subr.mxu0 0.0
    %131 = vmatpush1.msra.mxu0 0.0
    %132 = vmatprep.subr.mxu0 0.0
    %133 = vmatpush1.msra.mxu0 0.0
    %134 = vmatprep.subr.mxu0 0.0
    %135 = vmatpush1.msra.mxu0 0.0
    %136 = vmatprep.subr.mxu0 0.0
    %137 = vmatpush1.msra.mxu0 %v101
    %138 = vmatprep.subr.mxu0 0.0
    %139 = vmatpush2.msra.mxu0 0.0
    %140 = vmatprep.subr.mxu0 0.0
    %141 = vmatpush2.msra.mxu0 0.0
    %142 = vmatprep.subr.mxu0 0.0
    %143 = vmatpush2.msra.mxu0 0.0
    %144 = vmatprep.subr.mxu0 0.0
    %145 = vmatpush2.msra.mxu0 0.0
    %146 = vmatprep.subr.mxu0 0.0
    %147 = vmatpush2.msra.mxu0 0.0
    %148 = vmatprep.subr.mxu0 0.0
    %149 = vmatpush2.msra.mxu0 0.0
    %150 = vmatprep.subr.mxu0 0.0
    %151 = vmatpush2.msra.mxu0 0.0
    %152 = vmatprep.subr.mxu0 0.0
    %153 = vmatpush2.msra.mxu0 0.0
    %154 = vmatprep.subr.mxu0 0.0
    %155 = vmatpush2.msra.mxu0 0.0
    %156 = vmatprep.subr.mxu0 0.0
    %157 = vmatpush2.msra.mxu0 0.0
    %158 = vmatprep.subr.mxu0 0.0
    %159 = vmatpush2.msra.mxu0 0.0
    %160 = vmatprep.subr.mxu0 0.0
    %161 = vmatpush2.msra.mxu0 0.0
    %162 = vmatprep.subr.mxu0 0.0
    %163 = vmatpush2.msra.mxu0 0.0
    %164 = vmatprep.subr.mxu0 0.0
    %165 = vmatpush2.msra.mxu0 0.0
    %166 = vmatprep.subr.mxu0 0.0
    %167 = vmatpush2.msra.mxu0 0.0
    %168 = vmatprep.subr.mxu0 0.0
    %169 = vmatpush2.msra.mxu0 0.0
    %170 = vmatprep.mubr.f32.mxu0 0.0
    %171 = vmatmul.mubr.f32.gmra.mxu0 %v104
    %v172 = vpop.f32.mrf.mxu0
    %v173 = vadd.f32 0.0, %v172
    %v174 = vpop.f32.mrf.mxu0
    %175 = vdwg.mxu0
    %v176 = vld [vmem:[#allocation3] sm:$0xff]
    %v177 = vmul.f32 %v176, %v173
    %v178 = vld [vmem:[#allocation5] sm:$0xff]
    %v179 = vmul.f32 %v178, %v173
    %v180 = vld [vmem:[#allocation7] sm:$0xff]
    %v181 = vmul.f32 %v180, %v173
    %v182 = vld [vmem:[%s5] sm:$0xff]
    %v183 = vld [vmem:[%s5 + $0x8] sm:$0xff]
    %v184 = vld [vmem:[%s5 + $0x10] sm:$0xff]
    %v185 = vld [vmem:[%s5 + $0x18] sm:$0xff]
    %v186 = vld [vmem:[%s6] sm:$0xff]
    %v187 = vld [vmem:[%s6 + $0x8] sm:$0xff]
    %v188 = vld [vmem:[%s6 + $0x10] sm:$0xff]
    %v189 = vld [vmem:[%s6 + $0x18] sm:$0xff]
    %vm190 = vcmask 261120
    %v192 = vsel %vm190, %v179, 0
    %194 = vmatprep.subr.mxu0 0.0
    %195 = vmatpush1.msra.mxu0 0.0
    %196 = vmatprep.subr.mxu0 0.0
    %197 = vmatpush1.msra.mxu0 0.0
    %198 = vmatprep.subr.mxu0 0.0
    %199 = vmatpush1.msra.mxu0 0.0
    %200 = vmatprep.subr.mxu0 0.0
    %201 = vmatpush1.msra.mxu0 0.0
    %202 = vmatprep.subr.mxu0 0.0
    %203 = vmatpush1.msra.mxu0 0.0
    %204 = vmatprep.subr.mxu0 0.0
    %205 = vmatpush1.msra.mxu0 0.0
    %206 = vmatprep.subr.mxu0 0.0
    %207 = vmatpush1.msra.mxu0 0.0
    %208 = vmatprep.subr.mxu0 0.0
    %209 = vmatpush1.msra.mxu0 0.0
    %210 = vmatprep.subr.mxu0 0.0
    %211 = vmatpush1.msra.mxu0 0.0
    %212 = vmatprep.subr.mxu0 0.0
    %213 = vmatpush1.msra.mxu0 0.0
    %214 = vmatprep.subr.mxu0 0.0
    %215 = vmatpush1.msra.mxu0 0.0
    %216 = vmatprep.subr.mxu0 0.0
    %217 = vmatpush1.msra.mxu0 0.0
    %218 = vmatprep.subr.mxu0 0.0
    %219 = vmatpush1.msra.mxu0 %v189
    %220 = vmatprep.subr.mxu0 0.0
    %221 = vmatpush1.msra.mxu0 %v188
    %222 = vmatprep.subr.mxu0 0.0
    %223 = vmatpush1.msra.mxu0 %v187
    %224 = vmatprep.subr.mxu0 0.0
    %225 = vmatpush1.msra.mxu0 %v186
    %226 = vmatprep.subr.mxu0 0.0
    %227 = vmatpush2.msra.mxu0 0.0
    %228 = vmatprep.subr.mxu0 0.0
    %229 = vmatpush2.msra.mxu0 0.0
    %230 = vmatprep.subr.mxu0 0.0
    %231 = vmatpush2.msra.mxu0 0.0
    %232 = vmatprep.subr.mxu0 0.0
    %233 = vmatpush2.msra.mxu0 0.0
    %234 = vmatprep.subr.mxu0 0.0
    %235 = vmatpush2.msra.mxu0 0.0
    %236 = vmatprep.subr.mxu0 0.0
    %237 = vmatpush2.msra.mxu0 0.0
    %238 = vmatprep.subr.mxu0 0.0
    %239 = vmatpush2.msra.mxu0 0.0
    %240 = vmatprep.subr.mxu0 0.0
    %241 = vmatpush2.msra.mxu0 0.0
    %242 = vmatprep.subr.mxu0 0.0
    %243 = vmatpush2.msra.mxu0 0.0
    %244 = vmatprep.subr.mxu0 0.0
    %245 = vmatpush2.msra.mxu0 0.0
    %246 = vmatprep.subr.mxu0 0.0
    %247 = vmatpush2.msra.mxu0 0.0
    %248 = vmatprep.subr.mxu0 0.0
    %249 = vmatpush2.msra.mxu0 0.0
    %250 = vmatprep.subr.mxu0 0.0
    %251 = vmatpush2.msra.mxu0 0.0
    %252 = vmatprep.subr.mxu0 0.0
    %253 = vmatpush2.msra.mxu0 0.0
    %254 = vmatprep.subr.mxu0 0.0
    %255 = vmatpush2.msra.mxu0 0.0
    %256 = vmatprep.subr.mxu0 0.0
    %257 = vmatpush2.msra.mxu0 0.0
    %258 = vmatprep.mubr.f32.mxu0 0.0
    %259 = vmatmul.mubr.f32.gmra.mxu0 %v192
    %v260 = vpop.f32.mrf.mxu0
    %v261 = vadd.f32 0.0, %v260
    %v262 = vpop.f32.mrf.mxu0
    %263 = vdwg.mxu0
    %v265 = vsel %vm190, %v177, 0
    %267 = vmatprep.subr.mxu0 0.0
    %268 = vmatpush1.msra.mxu0 0.0
    %269 = vmatprep.subr.mxu0 0.0
    %270 = vmatpush1.msra.mxu0 0.0
    %271 = vmatprep.subr.mxu0 0.0
    %272 = vmatpush1.msra.mxu0 0.0
    %273 = vmatprep.subr.mxu0 0.0
    %274 = vmatpush1.msra.mxu0 0.0
    %275 = vmatprep.subr.mxu0 0.0
    %276 = vmatpush1.msra.mxu0 0.0
    %277 = vmatprep.subr.mxu0 0.0
    %278 = vmatpush1.msra.mxu0 0.0
    %279 = vmatprep.subr.mxu0 0.0
    %280 = vmatpush1.msra.mxu0 0.0
    %281 = vmatprep.subr.mxu0 0.0
    %282 = vmatpush1.msra.mxu0 0.0
    %283 = vmatprep.subr.mxu0 0.0
    %284 = vmatpush1.msra.mxu0 0.0
    %285 = vmatprep.subr.mxu0 0.0
    %286 = vmatpush1.msra.mxu0 0.0
    %287 = vmatprep.subr.mxu0 0.0
    %288 = vmatpush1.msra.mxu0 0.0
    %289 = vmatprep.subr.mxu0 0.0
    %290 = vmatpush1.msra.mxu0 0.0
    %291 = vmatprep.subr.mxu0 0.0
    %292 = vmatpush1.msra.mxu0 %v185
    %293 = vmatprep.subr.mxu0 0.0
    %294 = vmatpush1.msra.mxu0 %v184
    %295 = vmatprep.subr.mxu0 0.0
    %296 = vmatpush1.msra.mxu0 %v183
    %297 = vmatprep.subr.mxu0 0.0
    %298 = vmatpush1.msra.mxu0 %v182
    %299 = vmatprep.subr.mxu0 0.0
    %300 = vmatpush2.msra.mxu0 0.0
    %301 = vmatprep.subr.mxu0 0.0
    %302 = vmatpush2.msra.mxu0 0.0
    %303 = vmatprep.subr.mxu0 0.0
    %304 = vmatpush2.msra.mxu0 0.0
    %305 = vmatprep.subr.mxu0 0.0
    %306 = vmatpush2.msra.mxu0 0.0
    %307 = vmatprep.subr.mxu0 0.0
    %308 = vmatpush2.msra.mxu0 0.0
    %309 = vmatprep.subr.mxu0 0.0
    %310 = vmatpush2.msra.mxu0 0.0
    %311 = vmatprep.subr.mxu0 0.0
    %312 = vmatpush2.msra.mxu0 0.0
    %313 = vmatprep.subr.mxu0 0.0
    %314 = vmatpush2.msra.mxu0 0.0
    %315 = vmatprep.subr.mxu0 0.0
    %316 = vmatpush2.msra.mxu0 0.0
    %317 = vmatprep.subr.mxu0 0.0
    %318 = vmatpush2.msra.mxu0 0.0
    %319 = vmatprep.subr.mxu0 0.0
    %320 = vmatpush2.msra.mxu0 0.0
    %321 = vmatprep.subr.mxu0 0.0
    %322 = vmatpush2.msra.mxu0 0.0
    %323 = vmatprep.subr.mxu0 0.0
    %324 = vmatpush2.msra.mxu0 0.0
    %325 = vmatprep.subr.mxu0 0.0
    %326 = vmatpush2.msra.mxu0 0.0
    %327 = vmatprep.subr.mxu0 0.0
    %328 = vmatpush2.msra.mxu0 0.0
    %329 = vmatprep.subr.mxu0 0.0
    %330 = vmatpush2.msra.mxu0 0.0
    %331 = vmatprep.mubr.f32.mxu0 0.0
    %332 = vmatmul.mubr.f32.gmra.mxu0 %v265
    %v333 = vpop.f32.mrf.mxu0
    %v334 = vadd.f32 %v261, %v333
    %v335 = vpop.f32.mrf.mxu0
    %336 = vdwg.mxu0
    %v337 = vld [vmem:[%s7] sm:$0xff]
    %v338 = vld [vmem:[%s7 + $0x8] sm:$0xff]
    %v339 = vld [vmem:[%s7 + $0x10] sm:$0xff]
    %v340 = vld [vmem:[%s7 + $0x18] sm:$0xff]
    %v342 = vsel %vm190, %v181, 0
    %344 = vmatprep.subr.mxu0 0.0
    %345 = vmatpush1.msra.mxu0 0.0
    %346 = vmatprep.subr.mxu0 0.0
    %347 = vmatpush1.msra.mxu0 0.0
    %348 = vmatprep.subr.mxu0 0.0
    %349 = vmatpush1.msra.mxu0 0.0
    %350 = vmatprep.subr.mxu0 0.0
    %351 = vmatpush1.msra.mxu0 0.0
    %352 = vmatprep.subr.mxu0 0.0
    %353 = vmatpush1.msra.mxu0 0.0
    %354 = vmatprep.subr.mxu0 0.0
    %355 = vmatpush1.msra.mxu0 0.0
    %356 = vmatprep.subr.mxu0 0.0
    %357 = vmatpush1.msra.mxu0 0.0
    %358 = vmatprep.subr.mxu0 0.0
    %359 = vmatpush1.msra.mxu0 0.0
    %360 = vmatprep.subr.mxu0 0.0
    %361 = vmatpush1.msra.mxu0 0.0
    %362 = vmatprep.subr.mxu0 0.0
    %363 = vmatpush1.msra.mxu0 0.0
    %364 = vmatprep.subr.mxu0 0.0
    %365 = vmatpush1.msra.mxu0 0.0
    %366 = vmatprep.subr.mxu0 0.0
    %367 = vmatpush1.msra.mxu0 0.0
    %368 = vmatprep.subr.mxu0 0.0
    %369 = vmatpush1.msra.mxu0 %v340
    %370 = vmatprep.subr.mxu0 0.0
    %371 = vmatpush1.msra.mxu0 %v339
    %372 = vmatprep.subr.mxu0 0.0
    %373 = vmatpush1.msra.mxu0 %v338
    %374 = vmatprep.subr.mxu0 0.0
    %375 = vmatpush1.msra.mxu0 %v337
    %376 = vmatprep.subr.mxu0 0.0
    %377 = vmatpush2.msra.mxu0 0.0
    %378 = vmatprep.subr.mxu0 0.0
    %379 = vmatpush2.msra.mxu0 0.0
    %380 = vmatprep.subr.mxu0 0.0
    %381 = vmatpush2.msra.mxu0 0.0
    %382 = vmatprep.subr.mxu0 0.0
    %383 = vmatpush2.msra.mxu0 0.0
    %384 = vmatprep.subr.mxu0 0.0
    %385 = vmatpush2.msra.mxu0 0.0
    %386 = vmatprep.subr.mxu0 0.0
    %387 = vmatpush2.msra.mxu0 0.0
    %388 = vmatprep.subr.mxu0 0.0
    %389 = vmatpush2.msra.mxu0 0.0
    %390 = vmatprep.subr.mxu0 0.0
    %391 = vmatpush2.msra.mxu0 0.0
    %392 = vmatprep.subr.mxu0 0.0
    %393 = vmatpush2.msra.mxu0 0.0
    %394 = vmatprep.subr.mxu0 0.0
    %395 = vmatpush2.msra.mxu0 0.0
    %396 = vmatprep.subr.mxu0 0.0
    %397 = vmatpush2.msra.mxu0 0.0
    %398 = vmatprep.subr.mxu0 0.0
    %399 = vmatpush2.msra.mxu0 0.0
    %400 = vmatprep.subr.mxu0 0.0
    %401 = vmatpush2.msra.mxu0 0.0
    %402 = vmatprep.subr.mxu0 0.0
    %403 = vmatpush2.msra.mxu0 0.0
    %404 = vmatprep.subr.mxu0 0.0
    %405 = vmatpush2.msra.mxu0 0.0
    %406 = vmatprep.subr.mxu0 0.0
    %407 = vmatpush2.msra.mxu0 0.0
    %408 = vmatprep.mubr.f32.mxu0 0.0
    %409 = vmatmul.mubr.f32.gmra.mxu0 %v342
    %v410 = vpop.f32.mrf.mxu0
    %v411 = vadd.f32 0.0, %v410
    %v412 = vpop.f32.mrf.mxu0
    %413 = vdwg.mxu0
    %v414 = vadd.f32 %v334, %v411
    %v415 = vld [vmem:[%s8] sm:$0x1]
    %v417 = vlaneseq
    %v418 = vshrl.u32 %v417, 7
    %v419 = vsub.s32 0, %v418
    %v420 = vrot.slane %v415, %v419
    %v422 = vadd.f32 %v414, %v420
    %v423 = vmax.f32 %v422, 0.0
    %v424 = vld [vmem:[%s9] sm:$0xff]
    %v425 = vld [vmem:[%s9 + $0x8] sm:$0xff]
    %v426 = vld [vmem:[%s9 + $0x10] sm:$0xff]
    %v427 = vld [vmem:[%s9 + $0x18] sm:$0xff]
    %v428 = vld [vmem:[%s9 + $0x20] sm:$0xff]
    %v429 = vld [vmem:[%s9 + $0x28] sm:$0xff]
    %v430 = vld [vmem:[%s10] sm:$0x1]
    %v432 = vlaneseq
    %v433 = vshrl.u32 %v432, 7
    %v434 = vsub.s32 0, %v433
    %v435 = vrot.slane %v430, %v434
    %vm437 = vcmask 392192
    %v439 = vsel %vm437, %v423, 0
    %441 = vmatprep.subr.mxu0 0.0
    %442 = vmatpush1.msra.mxu0 0.0
    %443 = vmatprep.subr.mxu0 0.0
    %444 = vmatpush1.msra.mxu0 0.0
    %445 = vmatprep.subr.mxu0 0.0
    %446 = vmatpush1.msra.mxu0 0.0
    %447 = vmatprep.subr.mxu0 0.0
    %448 = vmatpush1.msra.mxu0 0.0
    %449 = vmatprep.subr.mxu0 0.0
    %450 = vmatpush1.msra.mxu0 0.0
    %451 = vmatprep.subr.mxu0 0.0
    %452 = vmatpush1.msra.mxu0 0.0
    %453 = vmatprep.subr.mxu0 0.0
    %454 = vmatpush1.msra.mxu0 0.0
    %455 = vmatprep.subr.mxu0 0.0
    %456 = vmatpush1.msra.mxu0 0.0
    %457 = vmatprep.subr.mxu0 0.0
    %458 = vmatpush1.msra.mxu0 0.0
    %459 = vmatprep.subr.mxu0 0.0
    %460 = vmatpush1.msra.mxu0 0.0
    %461 = vmatprep.subr.mxu0 0.0
    %462 = vmatpush1.msra.mxu0 %v429
    %463 = vmatprep.subr.mxu0 0.0
    %464 = vmatpush1.msra.mxu0 %v428
    %465 = vmatprep.subr.mxu0 0.0
    %466 = vmatpush1.msra.mxu0 %v427
    %467 = vmatprep.subr.mxu0 0.0
    %468 = vmatpush1.msra.mxu0 %v426
    %469 = vmatprep.subr.mxu0 0.0
    %470 = vmatpush1.msra.mxu0 %v425
    %471 = vmatprep.subr.mxu0 0.0
    %472 = vmatpush1.msra.mxu0 %v424
    %473 = vmatprep.subr.mxu0 0.0
    %474 = vmatpush2.msra.mxu0 0.0
    %475 = vmatprep.subr.mxu0 0.0
    %476 = vmatpush2.msra.mxu0 0.0
    %477 = vmatprep.subr.mxu0 0.0
    %478 = vmatpush2.msra.mxu0 0.0
    %479 = vmatprep.subr.mxu0 0.0
    %480 = vmatpush2.msra.mxu0 0.0
    %481 = vmatprep.subr.mxu0 0.0
    %482 = vmatpush2.msra.mxu0 0.0
    %483 = vmatprep.subr.mxu0 0.0
    %484 = vmatpush2.msra.mxu0 0.0
    %485 = vmatprep.subr.mxu0 0.0
    %486 = vmatpush2.msra.mxu0 0.0
    %487 = vmatprep.subr.mxu0 0.0
    %488 = vmatpush2.msra.mxu0 0.0
    %489 = vmatprep.subr.mxu0 0.0
    %490 = vmatpush2.msra.mxu0 0.0
    %491 = vmatprep.subr.mxu0 0.0
    %492 = vmatpush2.msra.mxu0 0.0
    %493 = vmatprep.subr.mxu0 0.0
    %494 = vmatpush2.msra.mxu0 0.0
    %495 = vmatprep.subr.mxu0 0.0
    %496 = vmatpush2.msra.mxu0 0.0
    %497 = vmatprep.subr.mxu0 0.0
    %498 = vmatpush2.msra.mxu0 0.0
    %499 = vmatprep.subr.mxu0 0.0
    %500 = vmatpush2.msra.mxu0 0.0
    %501 = vmatprep.subr.mxu0 0.0
    %502 = vmatpush2.msra.mxu0 0.0
    %503 = vmatprep.subr.mxu0 0.0
    %504 = vmatpush2.msra.mxu0 0.0
    %505 = vmatprep.mubr.f32.mxu0 0.0
    %506 = vmatmul.mubr.f32.gmra.mxu0 %v439
    %v507 = vpop.f32.mrf.mxu0
    %v508 = vadd.f32 %v435, %v507
    %v509 = vpop.f32.mrf.mxu0
    %510 = vdwg.mxu0
    %v511 = vmax.f32 %v508, 0.0
    %v512 = vld [vmem:[%s11] sm:$0xff]
    %v513 = vld [vmem:[%s11 + $0x8] sm:$0xff]
    %v514 = vld [vmem:[%s11 + $0x10] sm:$0xff]
    %v515 = vld [vmem:[#allocation2] sm:$0x1]
    %v517 = vlaneseq
    %v518 = vshrl.u32 %v517, 7
    %v519 = vsub.s32 0, %v518
    %v520 = vrot.slane %v515, %v519
    %vm522 = vcmask 195584
    %v524 = vsel %vm522, %v511, 0
    %526 = vmatprep.subr.mxu0 0.0
    %527 = vmatpush1.msra.mxu0 0.0
    %528 = vmatprep.subr.mxu0 0.0
    %529 = vmatpush1.msra.mxu0 0.0
    %530 = vmatprep.subr.mxu0 0.0
    %531 = vmatpush1.msra.mxu0 0.0
    %532 = vmatprep.subr.mxu0 0.0
    %533 = vmatpush1.msra.mxu0 0.0
    %534 = vmatprep.subr.mxu0 0.0
    %535 = vmatpush1.msra.mxu0 0.0
    %536 = vmatprep.subr.mxu0 0.0
    %537 = vmatpush1.msra.mxu0 0.0
    %538 = vmatprep.subr.mxu0 0.0
    %539 = vmatpush1.msra.mxu0 0.0
    %540 = vmatprep.subr.mxu0 0.0
    %541 = vmatpush1.msra.mxu0 0.0
    %542 = vmatprep.subr.mxu0 0.0
    %543 = vmatpush1.msra.mxu0 0.0
    %544 = vmatprep.subr.mxu0 0.0
    %545 = vmatpush1.msra.mxu0 0.0
    %546 = vmatprep.subr.mxu0 0.0
    %547 = vmatpush1.msra.mxu0 0.0
    %548 = vmatprep.subr.mxu0 0.0
    %549 = vmatpush1.msra.mxu0 0.0
    %550 = vmatprep.subr.mxu0 0.0
    %551 = vmatpush1.msra.mxu0 0.0
    %552 = vmatprep.subr.mxu0 0.0
    %553 = vmatpush1.msra.mxu0 %v514
    %554 = vmatprep.subr.mxu0 0.0
    %555 = vmatpush1.msra.mxu0 %v513
    %556 = vmatprep.subr.mxu0 0.0
    %557 = vmatpush1.msra.mxu0 %v512
    %558 = vmatprep.subr.mxu0 0.0
    %559 = vmatpush2.msra.mxu0 0.0
    %560 = vmatprep.subr.mxu0 0.0
    %561 = vmatpush2.msra.mxu0 0.0
    %562 = vmatprep.subr.mxu0 0.0
    %563 = vmatpush2.msra.mxu0 0.0
    %564 = vmatprep.subr.mxu0 0.0
    %565 = vmatpush2.msra.mxu0 0.0
    %566 = vmatprep.subr.mxu0 0.0
    %567 = vmatpush2.msra.mxu0 0.0
    %568 = vmatprep.subr.mxu0 0.0
    %569 = vmatpush2.msra.mxu0 0.0
    %570 = vmatprep.subr.mxu0 0.0
    %571 = vmatpush2.msra.mxu0 0.0
    %572 = vmatprep.subr.mxu0 0.0
    %573 = vmatpush2.msra.mxu0 0.0
    %574 = vmatprep.subr.mxu0 0.0
    %575 = vmatpush2.msra.mxu0 0.0
    %576 = vmatprep.subr.mxu0 0.0
    %577 = vmatpush2.msra.mxu0 0.0
    %578 = vmatprep.subr.mxu0 0.0
    %579 = vmatpush2.msra.mxu0 0.0
    %580 = vmatprep.subr.mxu0 0.0
    %581 = vmatpush2.msra.mxu0 0.0
    %582 = vmatprep.subr.mxu0 0.0
    %583 = vmatpush2.msra.mxu0 0.0
    %584 = vmatprep.subr.mxu0 0.0
    %585 = vmatpush2.msra.mxu0 0.0
    %586 = vmatprep.subr.mxu0 0.0
    %587 = vmatpush2.msra.mxu0 0.0
    %588 = vmatprep.subr.mxu0 0.0
    %589 = vmatpush2.msra.mxu0 0.0
    %590 = vmatprep.mubr.f32.mxu0 0.0
    %591 = vmatmul.mubr.f32.gmra.mxu0 %v524
    %v592 = vpop.f32.mrf.mxu0
    %v593 = vadd.f32 %v520, %v592
    %v594 = vpop.f32.mrf.mxu0
    %595 = vdwg.mxu0
    %v596 = vxor.u32 %v593, 2147483648
    %v597 = vmul.f32 %v596, 1.442695
    %v598 = vpow.pop %v597
    %v599 = vadd.f32 %v598, 1.0
    %v600 = vrcp.pop %v599
    %v601 = vmul.f32 1.0, %v600
    %vm602 = vcmask 7168
    %603 = vst.msk [vmem:[%s13] sm:$0xff] %vm602, %v601
    // Predicated region
    $region70: #{tpu_custom_call.1} parent=1 // pred_check
      _
    $region71: #{tpu_custom_call.1} parent=1 // pred_check_branch
      %605 = sbr.rel (0) target = $region73
    $region72: #{tpu_custom_call.1} parent=1 // pred_region
      _
    $region73: #{tpu_custom_call.1} parent=1 // pred_fallthru
      _
    // Predicated region
    $region74: #{tpu_custom_call.1} parent=1 // pred_check
      _
    $region75: #{tpu_custom_call.1} parent=1 // pred_check_branch
      %607 = sbr.rel (0) target = $region77
    $region76: #{tpu_custom_call.1} parent=1 // pred_region
      _
    $region77: #{tpu_custom_call.1} parent=1 // pred_fallthru
      _
    %608 = vsyncpa [#allocation4], 1
    %609 = vsyncpa [#allocation6], 1
    %610 = vsyncpa [#allocation9], 1

</llo_original>
